<compile_context>
chip_gen: v7x
topology: tpu7x:2x2x1
jax: 0.10.0
libtpu: 0.0.40
codegen_flags: <defaults>
</compile_context>

<pallas_src>
import functools

import jax
import jax.numpy as jnp
from jax.experimental import pallas as pl
from jax.experimental.pallas import tpu as pltpu


def _round_up(x, m):
    return ((x + m - 1) // m) * m


# ----------------------------------------------------------------------------- kernels


def boom_kernel_fused(x_ref, w1_ref, b1_ref, w2_ref, b2_ref, o_ref):
    """Fast path: full hidden dim resident in VMEM, 1-D row grid."""
    hid = jnp.dot(x_ref[...], w1_ref[...], preferred_element_type=jnp.float32)
    hid = hid + b1_ref[...].astype(jnp.float32)
    # GELU (BERT sigmoid approximation): x * sigmoid(1.702 * x) -> EUP slot.
    hid = hid * jax.nn.sigmoid(1.702 * hid)
    # TODO(synk): dropout is identity here (inference/eval semantics); training-time
    # dropout would need pltpu.prng_random_bits masking + 1/(1-p) scaling.
    out = jnp.dot(hid.astype(w2_ref.dtype), w2_ref[...],
                  preferred_element_type=jnp.float32)
    o_ref[...] = (out + b2_ref[...].astype(jnp.float32)).astype(o_ref.dtype)


def boom_kernel_tiled_f32(x_ref, w1_ref, b1_ref, w2_ref, b2_ref, o_ref):
    """Hidden-tiled path, f32 output: accumulate directly into o_ref (resident)."""
    h_idx = pl.program_id(1)
    hid = jnp.dot(x_ref[...], w1_ref[...], preferred_element_type=jnp.float32)
    hid = hid + b1_ref[...].astype(jnp.float32)
    hid = hid * jax.nn.sigmoid(1.702 * hid)
    part = jnp.dot(hid.astype(w2_ref.dtype), w2_ref[...],
                   preferred_element_type=jnp.float32)

    @pl.when(h_idx == 0)
    def _():
        o_ref[...] = part + b2_ref[...].astype(jnp.float32)

    @pl.when(h_idx > 0)
    def _():
        o_ref[...] += part


def boom_kernel_tiled_acc(x_ref, w1_ref, b1_ref, w2_ref, b2_ref, o_ref, acc_ref):
    """Hidden-tiled path, non-f32 output: f32 scratch accumulator + finalize cast."""
    h_idx = pl.program_id(1)

    @pl.when(h_idx == 0)
    def _():
        acc_ref[...] = jnp.zeros_like(acc_ref)

    hid = jnp.dot(x_ref[...], w1_ref[...], preferred_element_type=jnp.float32)
    hid = hid + b1_ref[...].astype(jnp.float32)
    hid = hid * jax.nn.sigmoid(1.702 * hid)
    acc_ref[...] += jnp.dot(hid.astype(w2_ref.dtype), w2_ref[...],
                            preferred_element_type=jnp.float32)

    @pl.when(h_idx == pl.num_programs(1) - 1)
    def _():
        o_ref[...] = (acc_ref[...] + b2_ref[...].astype(jnp.float32)).astype(o_ref.dtype)


# ----------------------------------------------------------------------------- planning


def _device_plan_params():
    """Per-generation VMEM budget/cap, MXU row alignment and megacore hint."""
    try:
        kind = jax.devices()[0].device_kind.lower()
    except Exception:
        kind = ""
    if "v7" in kind:
        # 64 MiB VMEM per TensorCore, 2 TCs/chip, 256x256 MXU.
        return dict(budget=48 * 2**20, cap=56 * 2**20, align=256, want_two=True)
    if "v5 lite" in kind or "v5e" in kind or "v5lite" in kind:
        # 128 MiB VMEM, 128x128 MXUs.
        return dict(budget=100 * 2**20, cap=108 * 2**20, align=128, want_two=False)
    if "v6" in kind:
        # 128 MiB VMEM, 256x256 MXUs.
        return dict(budget=100 * 2**20, cap=108 * 2**20, align=256, want_two=False)
    # Unknown generation: be conservative.
    return dict(budget=48 * 2**20, cap=56 * 2**20, align=128, want_two=False)


def _plan_tiles(rows, D, H, O, x_isz, w_isz, out_isz, *, budget, align, want_two,
                block_m_max, block_h_max, allow_fast_path):
    """Pick (use_fast, bm, bh, est_vmem_bytes)."""
    headroom = 2 * 1024 * 1024
    H128 = _round_up(H, 128)

    bm_cap = min(block_m_max, _round_up(rows, align))
    bm_cap = max(align, (bm_cap // align) * align)
    if want_two and rows >= 2 * align:
        # Keep >= 2 row tiles so the "parallel" axis can shard across both v7x TCs.
        bm_cap = min(bm_cap, _round_up((rows + 1) // 2, align))

    def fast_bytes(bm):
        return (2 * bm * D * x_isz                      # x tiles (double-buffered)
                + 2 * D * H * w_isz + 2 * H * O * w_isz  # resident weights (2 bufs)
                + 4 * (H + O) * 4                        # biases
                + 2 * bm * O * out_isz                   # output tiles
                + bm * H128 * (4 + w_isz)                # hid f32 + cast copy
                + headroom)

    def tiled_bytes(bm, bh):
        use_acc = out_isz != 4
        return (2 * bm * D * x_isz
                + 2 * D * bh * w_isz + 2 * bh * O * w_isz
                + 4 * (bh + O) * 4
                + 2 * bm * O * out_isz
                + (bm * O * 4 if use_acc else 0)
                + bm * bh * (4 + w_isz)
                + headroom)

    bm_candidates = list(range(bm_cap, 0, -align))

    if allow_fast_path:
        for bm in bm_candidates:
            fb = fast_bytes(bm)
            if fb <= budget:
                return True, bm, H, fb

    bh_cap = min(max(block_h_max, 128), _round_up(H, 128))
    bh_candidates = [bh for bh in (2048, 1024, 512, 384, 256, 128) if bh <= bh_cap]
    if not bh_candidates:
        bh_candidates = [128]
    for bm in bm_candidates:            # biggest row tile first (weight streaming)
        for bh in bh_candidates:        # then biggest hidden tile (acc RMW)
            tb = tiled_bytes(bm, bh)
            if tb <= budget:
                return False, bm, bh, tb
    # Nothing fits the budget: fall back to the smallest tiles anyway.
    return False, align, 128, tiled_bytes(align, 128)


# ----------------------------------------------------------------------------- wrapper


@functools.partial(jax.jit,
                   static_argnames=("block_m_max", "block_h_max", "allow_fast_path"))
def boom_forward(x, w1, b1, w2, b2, *, block_m_max=1024, block_h_max=2048,
                 allow_fast_path=True):
    """x: (B, S, D). w1: (D, H), b1: (H,), w2: (H, O), b2: (O,)."""
    B, S, D = x.shape
    H = w1.shape[1]
    O = w2.shape[1]
    rows = B * S

    out_dtype = jnp.dtype(x.dtype)
    x_isz = jnp.dtype(x.dtype).itemsize
    w_isz = jnp.dtype(w1.dtype).itemsize
    out_isz = out_dtype.itemsize

    hw = _device_plan_params()
    use_fast, bm, bh, est_bytes = _plan_tiles(
        rows, D, H, O, x_isz, w_isz, out_isz,
        budget=hw["budget"], align=hw["align"], want_two=hw["want_two"],
        block_m_max=block_m_max, block_h_max=block_h_max,
        allow_fast_path=allow_fast_path)

    rows_p = _round_up(rows, bm)
    x2 = x.reshape(rows, D)
    if rows_p != rows:
        x2 = jnp.pad(x2, ((0, rows_p - rows), (0, 0)))

    vmem_limit = int(min(hw["cap"], est_bytes + 6 * 1024 * 1024))

    if use_fast:
        H_p = H
        b1_2 = b1.reshape(1, H_p)
        b2_2 = b2.reshape(1, O)
        grid = (rows_p // bm,)
        weight_fetches = 1
        in_specs = [
            pl.BlockSpec((bm, D), lambda i: (i, 0)),
            pl.BlockSpec((D, H_p), lambda i: (0, 0)),
            pl.BlockSpec((1, H_p), lambda i: (0, 0)),
            pl.BlockSpec((H_p, O), lambda i: (0, 0)),
            pl.BlockSpec((1, O), lambda i: (0, 0)),
        ]
        out_spec = pl.BlockSpec((bm, O), lambda i: (i, 0))
        scratch = []
        kernel = boom_kernel_fused
        dim_sem = ("parallel",)
    else:
        H_p = _round_up(H, bh)
        if H_p != H:
            # Zero-padded hidden units give GELU(0)=0 through zero W2 rows -> exact.
            w1 = jnp.pad(w1, ((0, 0), (0, H_p - H)))
            b1 = jnp.pad(b1, (0, H_p - H))
            w2 = jnp.pad(w2, ((0, H_p - H), (0, 0)))
        b1_2 = b1.reshape(1, H_p)
        b2_2 = b2.reshape(1, O)
        grid = (rows_p // bm, H_p // bh)
        weight_fetches = grid[0]
        in_specs = [
            pl.BlockSpec((bm, D), lambda i, h: (i, 0)),
            pl.BlockSpec((D, bh), lambda i, h: (0, h)),
            pl.BlockSpec((1, bh), lambda i, h: (0, h)),
            pl.BlockSpec((bh, O), lambda i, h: (h, 0)),
            pl.BlockSpec((1, O), lambda i, h: (0, 0)),
        ]
        out_spec = pl.BlockSpec((bm, O), lambda i, h: (i, 0))
        if out_dtype == jnp.float32:
            scratch = []
            kernel = boom_kernel_tiled_f32
        else:
            scratch = [pltpu.VMEM((bm, O), jnp.float32)]
            kernel = boom_kernel_tiled_acc
        dim_sem = ("parallel", "arbitrary")

    cost = pl.CostEstimate(
        flops=2 * rows_p * D * H_p + 2 * rows_p * H_p * O,
        transcendentals=rows_p * H_p,
        bytes_accessed=(rows_p * D * x_isz
                        + weight_fetches * (D * H_p + H_p * O) * w_isz
                        + rows_p * O * out_isz
                        + (H_p + O) * 4),
    )

    out2 = pl.pallas_call(
        kernel,
        out_shape=jax.ShapeDtypeStruct((rows_p, O), out_dtype),
        grid_spec=pltpu.PrefetchScalarGridSpec(
            num_scalar_prefetch=0,
            grid=grid,
            in_specs=in_specs,
            out_specs=out_spec,
            scratch_shapes=scratch,
        ),
        compiler_params=pltpu.CompilerParams(
            dimension_semantics=dim_sem,
            vmem_limit_bytes=vmem_limit,
        ),
        cost_estimate=cost,
    )(x2, w1, b1_2, w2, b2_2)

    return out2[:rows].reshape(B, S, O)


# ----------------------------------------------------------------------------- reference


def init_boom_params(key, in_dim, hidden_dim=-1, out_dim=-1):
    """Deterministic init mimicking nn.Linear shapes; weights stored pre-transposed
    as (in, out) so the kernel does x @ W."""
    if hidden_dim == -1:
        hidden_dim = 2 * in_dim
    if out_dim == -1:
        out_dim = in_dim
    k1, k2, k3, k4 = jax.random.split(key, 4)
    lim1 = 1.0 / jnp.sqrt(in_dim)
    lim2 = 1.0 / jnp.sqrt(hidden_dim)
    w1 = jax.random.uniform(k1, (in_dim, hidden_dim), jnp.float32, -lim1, lim1)
    b1 = jax.random.uniform(k2, (hidden_dim,), jnp.float32, -lim1, lim1)
    w2 = jax.random.uniform(k3, (hidden_dim, out_dim), jnp.float32, -lim2, lim2)
    b2 = jax.random.uniform(k4, (out_dim,), jnp.float32, -lim2, lim2)
    return w1, b1, w2, b2


def boom_reference(x, w1, b1, w2, b2):
    h = x.astype(jnp.float32) @ w1.astype(jnp.float32) + b1.astype(jnp.float32)
    h = h * jax.nn.sigmoid(1.702 * h)
    return h @ w2.astype(jnp.float32) + b2.astype(jnp.float32)


if __name__ == "__main__":
    key = jax.random.PRNGKey(0)
    kx, kp = jax.random.split(key)

    # Small, lane-dense demo consistent with Boom defaults: in_dim=128 -> hidden=256,
    # out=128; batch=2, seq=8.
    B, S, D = 2, 8, 128
    x = jax.random.normal(kx, (B, S, D), dtype=jnp.float32)
    w1, b1, w2, b2 = init_boom_params(kp, D)  # hidden = 256, out = 128
    ref = boom_reference(x, w1, b1, w2, b2)

    # 1) Default path (fast path: full weights resident, 1-D row grid).
    out_fast = jax.block_until_ready(boom_forward(x, w1, b1, w2, b2))
    assert out_fast.shape == (B, S, D), out_fast.shape
    assert jnp.allclose(out_fast, ref, atol=1e-4, rtol=1e-4), "fast path mismatch"

    # 2) Forced hidden-tiled path (f32 direct o_ref accumulation), 2 hidden tiles.
    out_tiled = jax.block_until_ready(
        boom_forward(x, w1, b1, w2, b2, allow_fast_path=False, block_h_max=128))
    assert jnp.allclose(out_tiled, ref, atol=1e-4, rtol=1e-4), "tiled path mismatch"

    # 3) Forced hidden-tiled path with bf16 inputs (f32 scratch accumulator path).
    xb = x.astype(jnp.bfloat16)
    w1b, b1b, w2b, b2b = (a.astype(jnp.bfloat16) for a in (w1, b1, w2, b2))
    ref_b = boom_reference(xb, w1b, b1b, w2b, b2b)
    out_bf16 = jax.block_until_ready(
        boom_forward(xb, w1b, b1b, w2b, b2b, allow_fast_path=False, block_h_max=128))
    assert out_bf16.dtype == jnp.bfloat16
    assert jnp.allclose(out_bf16.astype(jnp.float32), ref_b, atol=3e-2, rtol=3e-2), \
        "bf16 tiled path mismatch"

    print("KERNEL_OK")
</pallas_src>

<mosaic_0001>
module attributes {stable_mosaic.version = 11 : i64} {
  func.func @boom_kernel_fused(%arg0: i32, %arg1: memref<128x128xf32, #tpu.memory_space<vmem>>, %arg2: memref<128x256xf32, #tpu.memory_space<vmem>>, %arg3: memref<1x256xf32, #tpu.memory_space<vmem>>, %arg4: memref<256x128xf32, #tpu.memory_space<vmem>>, %arg5: memref<1x128xf32, #tpu.memory_space<vmem>>, %arg6: memref<128x128xf32, #tpu.memory_space<vmem>>) attributes {dimension_semantics = [#tpu.dimension_semantics<parallel>], iteration_bounds = array<i64: 1>, scalar_prefetch = 0 : i64, scratch_operands = 0 : i64, tpu.core_type = #tpu.core_type<tc>, window_params = [{transform_indices = @transform_0, window_bounds = array<i64: 128, 128>}, {pipeline_mode = #tpu.pipeline_mode<synchronous>, transform_indices = @transform_1, window_bounds = array<i64: 128, 256>}, {pipeline_mode = #tpu.pipeline_mode<synchronous>, transform_indices = @transform_2, window_bounds = array<i64: 1, 256>}, {pipeline_mode = #tpu.pipeline_mode<synchronous>, transform_indices = @transform_3, window_bounds = array<i64: 256, 128>}, {pipeline_mode = #tpu.pipeline_mode<synchronous>, transform_indices = @transform_4, window_bounds = array<i64: 1, 128>}, {transform_indices = @transform_5, window_bounds = array<i64: 128, 128>}]} {
    %c0 = arith.constant 0 : index
    %c0_0 = arith.constant 0 : index
    %0 = vector.load %arg1[%c0, %c0_0] : memref<128x128xf32, #tpu.memory_space<vmem>>, vector<128x128xf32>
    %c0_1 = arith.constant 0 : index
    %c0_2 = arith.constant 0 : index
    %1 = vector.load %arg2[%c0_1, %c0_2] : memref<128x256xf32, #tpu.memory_space<vmem>>, vector<128x256xf32>
    %cst = arith.constant dense<0.000000e+00> : vector<128x256xf32>
    %2 = tpu.matmul %0, %1, %cst {dimension_numbers = #tpu.dot_dimension_numbers<[1], [0], [0], [1], [0, 0, 1, 1], [], []>} : vector<128x128xf32>, vector<128x256xf32>, vector<128x256xf32> -> vector<128x256xf32>
    %c0_3 = arith.constant 0 : index
    %c0_4 = arith.constant 0 : index
    %3 = vector.load %arg3[%c0_3, %c0_4] : memref<1x256xf32, #tpu.memory_space<vmem>>, vector<1x256xf32>
    %4 = vector.broadcast %3 : vector<1x256xf32> to vector<128x256xf32>
    %5 = arith.addf %2, %4 : vector<128x256xf32>
    %cst_5 = arith.constant 1.702000e+00 : f32
    %6 = vector.broadcast %cst_5 : f32 to vector<128x256xf32>
    %7 = arith.mulf %6, %5 : vector<128x256xf32>
    %8 = arith.negf %7 : vector<128x256xf32>
    %9 = math.exp %8 : vector<128x256xf32>
    %cst_6 = arith.constant 1.000000e+00 : f32
    %10 = vector.broadcast %cst_6 : f32 to vector<128x256xf32>
    %11 = arith.addf %10, %9 : vector<128x256xf32>
    %12 = arith.divf %10, %11 : vector<128x256xf32>
    %13 = arith.mulf %5, %12 : vector<128x256xf32>
    %c0_7 = arith.constant 0 : index
    %c0_8 = arith.constant 0 : index
    %14 = vector.load %arg4[%c0_7, %c0_8] : memref<256x128xf32, #tpu.memory_space<vmem>>, vector<256x128xf32>
    %cst_9 = arith.constant dense<0.000000e+00> : vector<128x128xf32>
    %15 = tpu.matmul %13, %14, %cst_9 {dimension_numbers = #tpu.dot_dimension_numbers<[1], [0], [0], [1], [0, 0, 1, 1], [], []>} : vector<128x256xf32>, vector<256x128xf32>, vector<128x128xf32> -> vector<128x128xf32>
    %c0_10 = arith.constant 0 : index
    %c0_11 = arith.constant 0 : index
    %16 = vector.load %arg5[%c0_10, %c0_11] : memref<1x128xf32, #tpu.memory_space<vmem>>, vector<1x128xf32>
    %17 = vector.broadcast %16 : vector<1x128xf32> to vector<128x128xf32>
    %18 = arith.addf %15, %17 : vector<128x128xf32>
    %c0_12 = arith.constant 0 : index
    %c0_13 = arith.constant 0 : index
    %19 = vector.load %arg6[%c0_12, %c0_13] : memref<128x128xf32, #tpu.memory_space<vmem>>, vector<128x128xf32>
    tpu.vector_store %arg6[%c0_12, %c0_13], %18 {strides = array<i32>} : memref<128x128xf32, #tpu.memory_space<vmem>>, vector<128x128xf32>,
    return
  }
  func.func @transform_0(%arg0: i32) -> (i32, i32) {
    %c0_i32 = arith.constant 0 : i32
    %c0_i32_0 = arith.constant 0 : i32
    return %arg0, %c0_i32 : i32, i32
  }
  func.func @transform_1(%arg0: i32) -> (i32, i32) {
    %c0_i32 = arith.constant 0 : i32
    %c0_i32_0 = arith.constant 0 : i32
    %c0_i32_1 = arith.constant 0 : i32
    return %c0_i32, %c0_i32_0 : i32, i32
  }
  func.func @transform_2(%arg0: i32) -> (i32, i32) {
    %c0_i32 = arith.constant 0 : i32
    %c0_i32_0 = arith.constant 0 : i32
    %c0_i32_1 = arith.constant 0 : i32
    return %c0_i32, %c0_i32_0 : i32, i32
  }
  func.func @transform_3(%arg0: i32) -> (i32, i32) {
    %c0_i32 = arith.constant 0 : i32
    %c0_i32_0 = arith.constant 0 : i32
    %c0_i32_1 = arith.constant 0 : i32
    return %c0_i32, %c0_i32_0 : i32, i32
  }
  func.func @transform_4(%arg0: i32) -> (i32, i32) {
    %c0_i32 = arith.constant 0 : i32
    %c0_i32_0 = arith.constant 0 : i32
    %c0_i32_1 = arith.constant 0 : i32
    return %c0_i32, %c0_i32_0 : i32, i32
  }
  func.func @transform_5(%arg0: i32) -> (i32, i32) {
    %c0_i32 = arith.constant 0 : i32
    %c0_i32_0 = arith.constant 0 : i32
    return %arg0, %c0_i32 : i32, i32
  }
}

</mosaic_0001>

<llo_original>
// kernel: boom_forward.1
$region0: #{boom_forward.1}
  #allocation0 [shape = 'u32[]', space=smem, size = 0x4, offset = 0x4, fixed_abs, tag = 'smem constant byte address 0x4 - core index']
  #allocation1 [shape = 'u32[144,128]{1,0:T(1,128)}', space=vmem, size = 0x12000, scoped, tag = 'internal scratch']
  %s0 = inlined_call_operand.vmem [shape: f32[128,128], index: 0, kind: input, shape index: {}]
  %s1 = inlined_call_operand.hbm [shape: f32[128,256], index: 1, kind: input, shape index: {}]
  %s2 = inlined_call_operand.vmem [shape: f32[1,256], index: 2, kind: input, shape index: {}]
  %s3 = inlined_call_operand.hbm [shape: f32[256,128], index: 3, kind: input, shape index: {}]
  %s4 = inlined_call_operand.vmem [shape: f32[1,128], index: 4, kind: input, shape index: {}]
  %s5 = inlined_call_operand.vmem [shape: f32[128,128], index: 5, kind: output, shape index: {}]
  %s6 = sld [smem:[#allocation0]]
  $region38: #{boom_forward.1} parent=0
    _
  %s8 = ssub.s32 1, %s6
  %s9 = scalar_select 0, %s8, %s6
  $region1: #{boom_forward.1} parent=0
    #allocation2 [shape = 'u8[131072]{0}', space=vmem, size = 0x20000, scoped, tag = 'input window, operand 1, single buffered']
    #allocation3 [shape = 's32[1]{0}', space=sflag, size = 0x4, scoped, tag = 'scoped memory for boom_forward.1']
    #allocation4 [shape = 'u8[131072]{0}', space=vmem, size = 0x20000, scoped, tag = 'input window, operand 3, single buffered']
    #allocation5 [shape = 's32[1]{0}', space=sflag, size = 0x4, scoped, tag = 'scoped memory for boom_forward.1']
    %10 = vsyncpa [#allocation3], 0
    %11 = vsyncpa [#allocation5], 0
    // Predicated region
    $region2: #{boom_forward.1} parent=1 // pred_check
      _
    $region3: #{boom_forward.1} parent=1 // pred_check_branch
      %13 = sbr.rel (0) target = $region5
    $region4: #{boom_forward.1} parent=1 // pred_region
      _
    $region5: #{boom_forward.1} parent=1 // pred_fallthru
      _
    // Predicated region
    $region6: #{boom_forward.1} parent=1 // pred_check
      _
    $region7: #{boom_forward.1} parent=1 // pred_check_branch
      %15 = sbr.rel (0) target = $region9
    $region8: #{boom_forward.1} parent=1 // pred_region
      %s17 = ssub.s32 4096, 4096
      %18 = vsyncadd [#allocation3], %s17
      %s19 = sshll.u32 [#allocation2], 4
      %s20 = int_to_ptr.vmem [resolvable:$true] %s19
      %25 = dma.hbm_to_vmem [thread:$0]  %s1, 4096, %s20, [#allocation3], 256, 256, 16
    $region9: #{boom_forward.1} parent=1 // pred_fallthru
      _
    // Predicated region
    $region10: #{boom_forward.1} parent=1 // pred_check
      _
    $region11: #{boom_forward.1} parent=1 // pred_check_branch
      %27 = sbr.rel (0) target = $region13
    $region12: #{boom_forward.1} parent=1 // pred_region
      _
    $region13: #{boom_forward.1} parent=1 // pred_fallthru
      _
    // Predicated region
    $region14: #{boom_forward.1} parent=1 // pred_check
      _
    $region15: #{boom_forward.1} parent=1 // pred_check_branch
      %29 = sbr.rel (0) target = $region17
    $region16: #{boom_forward.1} parent=1 // pred_region
      %s31 = ssub.s32 4096, 4096
      %32 = vsyncadd [#allocation5], %s31
      %s33 = sshll.u32 [#allocation4], 4
      %s34 = int_to_ptr.vmem [resolvable:$true] %s33
      %39 = dma.hbm_to_vmem [thread:$0]  %s3, 4096, %s34, [#allocation5], 128, 128, 8
    $region17: #{boom_forward.1} parent=1 // pred_fallthru
      _
    // Predicated region
    $region18: #{boom_forward.1} parent=1 // pred_check
      _
    $region19: #{boom_forward.1} parent=1 // pred_check_branch
      %41 = sbr.rel (0) target = $region21
    $region20: #{boom_forward.1} parent=1 // pred_region
      _
    $region21: #{boom_forward.1} parent=1 // pred_fallthru
      _
    // Predicated region
    $region22: #{boom_forward.1} parent=1 // pred_check
      _
    $region23: #{boom_forward.1} parent=1 // pred_check_branch
      %43 = sbr.rel (0) target = $region25
    $region24: #{boom_forward.1} parent=1 // pred_region
      %44 = dma.done [#allocation3], 4096
    $region25: #{boom_forward.1} parent=1 // pred_fallthru
      _
    // Predicated region
    $region26: #{boom_forward.1} parent=1 // pred_check
      _
    $region27: #{boom_forward.1} parent=1 // pred_check_branch
      %46 = sbr.rel (0) target = $region29
    $region28: #{boom_forward.1} parent=1 // pred_region
      %47 = dma.done [#allocation5], 4096
    $region29: #{boom_forward.1} parent=1 // pred_fallthru
      _
    %v48 = vld [vmem:[%s0] sm:$0xff]
    %v49 = vld [vmem:[%s0 + $0x8] sm:$0xff]
    %v50 = vld [vmem:[%s0 + $0x10] sm:$0xff]
    %v51 = vld [vmem:[%s0 + $0x18] sm:$0xff]
    %v52 = vld [vmem:[%s0 + $0x20] sm:$0xff]
    %v53 = vld [vmem:[%s0 + $0x28] sm:$0xff]
    %v54 = vld [vmem:[%s0 + $0x30] sm:$0xff]
    %v55 = vld [vmem:[%s0 + $0x38] sm:$0xff]
    %v56 = vld [vmem:[%s0 + $0x40] sm:$0xff]
    %v57 = vld [vmem:[%s0 + $0x48] sm:$0xff]
    %v58 = vld [vmem:[%s0 + $0x50] sm:$0xff]
    %v59 = vld [vmem:[%s0 + $0x58] sm:$0xff]
    %v60 = vld [vmem:[%s0 + $0x60] sm:$0xff]
    %v61 = vld [vmem:[%s0 + $0x68] sm:$0xff]
    %v62 = vld [vmem:[%s0 + $0x70] sm:$0xff]
    %v63 = vld [vmem:[%s0 + $0x78] sm:$0xff]
    %v64 = vld [vmem:[#allocation2] sm:$0xff]
    %v65 = vld [vmem:[#allocation2 + $0x8] sm:$0xff]
    %v66 = vld [vmem:[#allocation2 + $0x10] sm:$0xff]
    %v67 = vld [vmem:[#allocation2 + $0x18] sm:$0xff]
    %v68 = vld [vmem:[#allocation2 + $0x20] sm:$0xff]
    %v69 = vld [vmem:[#allocation2 + $0x28] sm:$0xff]
    %v70 = vld [vmem:[#allocation2 + $0x30] sm:$0xff]
    %v71 = vld [vmem:[#allocation2 + $0x38] sm:$0xff]
    %v72 = vld [vmem:[#allocation2 + $0x40] sm:$0xff]
    %v73 = vld [vmem:[#allocation2 + $0x48] sm:$0xff]
    %v74 = vld [vmem:[#allocation2 + $0x50] sm:$0xff]
    %v75 = vld [vmem:[#allocation2 + $0x58] sm:$0xff]
    %v76 = vld [vmem:[#allocation2 + $0x60] sm:$0xff]
    %v77 = vld [vmem:[#allocation2 + $0x68] sm:$0xff]
    %v78 = vld [vmem:[#allocation2 + $0x70] sm:$0xff]
    %v79 = vld [vmem:[#allocation2 + $0x78] sm:$0xff]
    %v80 = vld [vmem:[#allocation2 + $0x80] sm:$0xff]
    %v81 = vld [vmem:[#allocation2 + $0x88] sm:$0xff]
    %v82 = vld [vmem:[#allocation2 + $0x90] sm:$0xff]
    %v83 = vld [vmem:[#allocation2 + $0x98] sm:$0xff]
    %v84 = vld [vmem:[#allocation2 + $0xa0] sm:$0xff]
    %v85 = vld [vmem:[#allocation2 + $0xa8] sm:$0xff]
    %v86 = vld [vmem:[#allocation2 + $0xb0] sm:$0xff]
    %v87 = vld [vmem:[#allocation2 + $0xb8] sm:$0xff]
    %v88 = vld [vmem:[#allocation2 + $0xc0] sm:$0xff]
    %v89 = vld [vmem:[#allocation2 + $0xc8] sm:$0xff]
    %v90 = vld [vmem:[#allocation2 + $0xd0] sm:$0xff]
    %v91 = vld [vmem:[#allocation2 + $0xd8] sm:$0xff]
    %v92 = vld [vmem:[#allocation2 + $0xe0] sm:$0xff]
    %v93 = vld [vmem:[#allocation2 + $0xe8] sm:$0xff]
    %v94 = vld [vmem:[#allocation2 + $0xf0] sm:$0xff]
    %v95 = vld [vmem:[#allocation2 + $0xf8] sm:$0xff]
    %v96 = vld [vmem:[%s2] sm:$0x3]
    %v98 = vlaneseq
    %v99 = vshrl.u32 %v98, 7
    %v100 = vsub.s32 0, %v99
    %v101 = vrot.slane %v96, %v100
    %v102 = vlaneseq
    %v103 = vshrl.u32 %v102, 7
    %v104 = vsub.s32 1, %v103
    %v105 = vrot.slane %v96, %v104
    %108 = vmatprep.subr.mxu0 %v65
    %109 = vmatpush1.msra.mxu0 %v64
    %110 = vmatprep.subr.mxu0 %v67
    %111 = vmatpush1.msra.mxu0 %v66
    %112 = vmatprep.subr.mxu0 %v69
    %113 = vmatpush1.msra.mxu0 %v68
    %114 = vmatprep.subr.mxu0 %v71
    %115 = vmatpush1.msra.mxu0 %v70
    %116 = vmatprep.subr.mxu0 %v73
    %117 = vmatpush1.msra.mxu0 %v72
    %118 = vmatprep.subr.mxu0 %v75
    %119 = vmatpush1.msra.mxu0 %v74
    %120 = vmatprep.subr.mxu0 %v77
    %121 = vmatpush1.msra.mxu0 %v76
    %122 = vmatprep.subr.mxu0 %v79
    %123 = vmatpush1.msra.mxu0 %v78
    %124 = vmatprep.subr.mxu0 %v81
    %125 = vmatpush1.msra.mxu0 %v80
    %126 = vmatprep.subr.mxu0 %v83
    %127 = vmatpush1.msra.mxu0 %v82
    %128 = vmatprep.subr.mxu0 %v85
    %129 = vmatpush1.msra.mxu0 %v84
    %130 = vmatprep.subr.mxu0 %v87
    %131 = vmatpush1.msra.mxu0 %v86
    %132 = vmatprep.subr.mxu0 %v89
    %133 = vmatpush1.msra.mxu0 %v88
    %134 = vmatprep.subr.mxu0 %v91
    %135 = vmatpush1.msra.mxu0 %v90
    %136 = vmatprep.subr.mxu0 %v93
    %137 = vmatpush1.msra.mxu0 %v92
    %138 = vmatprep.subr.mxu0 %v95
    %139 = vmatpush1.msra.mxu0 %v94
    %140 = vmatprep.subr.mxu0 0.0
    %141 = vmatpush1.msra.mxu0 0.0
    %142 = vmatprep.subr.mxu0 0.0
    %143 = vmatpush1.msra.mxu0 0.0
    %144 = vmatprep.subr.mxu0 0.0
    %145 = vmatpush1.msra.mxu0 0.0
    %146 = vmatprep.subr.mxu0 0.0
    %147 = vmatpush1.msra.mxu0 0.0
    %148 = vmatprep.subr.mxu0 0.0
    %149 = vmatpush1.msra.mxu0 0.0
    %150 = vmatprep.subr.mxu0 0.0
    %151 = vmatpush1.msra.mxu0 0.0
    %152 = vmatprep.subr.mxu0 0.0
    %153 = vmatpush1.msra.mxu0 0.0
    %154 = vmatprep.subr.mxu0 0.0
    %155 = vmatpush1.msra.mxu0 0.0
    %156 = vmatprep.subr.mxu0 0.0
    %157 = vmatpush1.msra.mxu0 0.0
    %158 = vmatprep.subr.mxu0 0.0
    %159 = vmatpush1.msra.mxu0 0.0
    %160 = vmatprep.subr.mxu0 0.0
    %161 = vmatpush1.msra.mxu0 0.0
    %162 = vmatprep.subr.mxu0 0.0
    %163 = vmatpush1.msra.mxu0 0.0
    %164 = vmatprep.subr.mxu0 0.0
    %165 = vmatpush1.msra.mxu0 0.0
    %166 = vmatprep.subr.mxu0 0.0
    %167 = vmatpush1.msra.mxu0 0.0
    %168 = vmatprep.subr.mxu0 0.0
    %169 = vmatpush1.msra.mxu0 0.0
    %170 = vmatprep.subr.mxu0 0.0
    %171 = vmatpush1.msra.mxu0 0.0
    %172 = vmatprep.mubr.f32.mxu0 0.0
    %173 = vmatmul.mubr.f32.gmra.mrb[0].mxu0 %v48
    %v174 = vpop.f32.mrb[0].mxu0
    %v175 = vadd.f32 %v101, %v174
    %v176 = vpop.f32.mrb[0].mxu0
    %v177 = vadd.f32 %v105, %v176
    %178 = vmatprep.mubr.f32.mxu0 0.0
    %179 = vmatmul.mubr.f32.gmra.mrb[0].mxu0 %v49
    %v180 = vpop.f32.mrb[0].mxu0
    %v181 = vadd.f32 %v101, %v180
    %v182 = vpop.f32.mrb[0].mxu0
    %v183 = vadd.f32 %v105, %v182
    %184 = vmatprep.mubr.f32.mxu0 0.0
    %185 = vmatmul.mubr.f32.gmra.mrb[0].mxu0 %v50
    %v186 = vpop.f32.mrb[0].mxu0
    %v187 = vadd.f32 %v101, %v186
    %v188 = vpop.f32.mrb[0].mxu0
    %v189 = vadd.f32 %v105, %v188
    %190 = vmatprep.mubr.f32.mxu0 0.0
    %191 = vmatmul.mubr.f32.gmra.mrb[0].mxu0 %v51
    %v192 = vpop.f32.mrb[0].mxu0
    %v193 = vadd.f32 %v101, %v192
    %v194 = vpop.f32.mrb[0].mxu0
    %v195 = vadd.f32 %v105, %v194
    %196 = vmatprep.mubr.f32.mxu0 0.0
    %197 = vmatmul.mubr.f32.gmra.mrb[0].mxu0 %v52
    %v198 = vpop.f32.mrb[0].mxu0
    %v199 = vadd.f32 %v101, %v198
    %v200 = vpop.f32.mrb[0].mxu0
    %v201 = vadd.f32 %v105, %v200
    %202 = vmatprep.mubr.f32.mxu0 0.0
    %203 = vmatmul.mubr.f32.gmra.mrb[0].mxu0 %v53
    %v204 = vpop.f32.mrb[0].mxu0
    %v205 = vadd.f32 %v101, %v204
    %v206 = vpop.f32.mrb[0].mxu0
    %v207 = vadd.f32 %v105, %v206
    %208 = vmatprep.mubr.f32.mxu0 0.0
    %209 = vmatmul.mubr.f32.gmra.mrb[0].mxu0 %v54
    %v210 = vpop.f32.mrb[0].mxu0
    %v211 = vadd.f32 %v101, %v210
    %v212 = vpop.f32.mrb[0].mxu0
    %v213 = vadd.f32 %v105, %v212
    %214 = vmatprep.mubr.f32.mxu0 0.0
    %215 = vmatmul.mubr.f32.gmra.mrb[0].mxu0 %v55
    %v216 = vpop.f32.mrb[0].mxu0
    %v217 = vadd.f32 %v101, %v216
    %v218 = vpop.f32.mrb[0].mxu0
    %v219 = vadd.f32 %v105, %v218
    %220 = vmatprep.mubr.f32.mxu0 0.0
    %221 = vmatmul.mubr.f32.gmra.mrb[0].mxu0 %v56
    %v222 = vpop.f32.mrb[0].mxu0
    %v223 = vadd.f32 %v101, %v222
    %v224 = vpop.f32.mrb[0].mxu0
    %v225 = vadd.f32 %v105, %v224
    %226 = vmatprep.mubr.f32.mxu0 0.0
    %227 = vmatmul.mubr.f32.gmra.mrb[0].mxu0 %v57
    %v228 = vpop.f32.mrb[0].mxu0
    %v229 = vadd.f32 %v101, %v228
    %v230 = vpop.f32.mrb[0].mxu0
    %v231 = vadd.f32 %v105, %v230
    %232 = vmatprep.mubr.f32.mxu0 0.0
    %233 = vmatmul.mubr.f32.gmra.mrb[0].mxu0 %v58
    %v234 = vpop.f32.mrb[0].mxu0
    %v235 = vadd.f32 %v101, %v234
    %v236 = vpop.f32.mrb[0].mxu0
    %v237 = vadd.f32 %v105, %v236
    %238 = vmatprep.mubr.f32.mxu0 0.0
    %239 = vmatmul.mubr.f32.gmra.mrb[0].mxu0 %v59
    %v240 = vpop.f32.mrb[0].mxu0
    %v241 = vadd.f32 %v101, %v240
    %v242 = vpop.f32.mrb[0].mxu0
    %v243 = vadd.f32 %v105, %v242
    %244 = vmatprep.mubr.f32.mxu0 0.0
    %245 = vmatmul.mubr.f32.gmra.mrb[0].mxu0 %v60
    %v246 = vpop.f32.mrb[0].mxu0
    %v247 = vadd.f32 %v101, %v246
    %v248 = vpop.f32.mrb[0].mxu0
    %v249 = vadd.f32 %v105, %v248
    %250 = vmatprep.mubr.f32.mxu0 0.0
    %251 = vmatmul.mubr.f32.gmra.mrb[0].mxu0 %v61
    %v252 = vpop.f32.mrb[0].mxu0
    %v253 = vadd.f32 %v101, %v252
    %v254 = vpop.f32.mrb[0].mxu0
    %v255 = vadd.f32 %v105, %v254
    %256 = vmatprep.mubr.f32.mxu0 0.0
    %257 = vmatmul.mubr.f32.gmra.mrb[0].mxu0 %v62
    %v258 = vpop.f32.mrb[0].mxu0
    %v259 = vadd.f32 %v101, %v258
    %v260 = vpop.f32.mrb[0].mxu0
    %v261 = vadd.f32 %v105, %v260
    %262 = vmatprep.mubr.f32.mxu0 0.0
    %263 = vmatmul.mubr.f32.gmra.mrb[0].mxu0 %v63
    %v264 = vpop.f32.mrb[0].mxu0
    %v265 = vadd.f32 %v101, %v264
    %v266 = vpop.f32.mrb[0].mxu0
    %v267 = vadd.f32 %v105, %v266
    %268 = vdwg.mxu0
    %v269 = vmul.f32 %v175, 1.702
    %v270 = vmul.f32 %v177, 1.702
    %v271 = vmul.f32 %v181, 1.702
    %v272 = vmul.f32 %v183, 1.702
    %v273 = vmul.f32 %v187, 1.702
    %v274 = vmul.f32 %v189, 1.702
    %v275 = vmul.f32 %v193, 1.702
    %v276 = vmul.f32 %v195, 1.702
    %v277 = vmul.f32 %v199, 1.702
    %v278 = vmul.f32 %v201, 1.702
    %v279 = vmul.f32 %v205, 1.702
    %v280 = vmul.f32 %v207, 1.702
    %v281 = vmul.f32 %v211, 1.702
    %v282 = vmul.f32 %v213, 1.702
    %v283 = vmul.f32 %v217, 1.702
    %v284 = vmul.f32 %v219, 1.702
    %v285 = vmul.f32 %v223, 1.702
    %v286 = vmul.f32 %v225, 1.702
    %v287 = vmul.f32 %v229, 1.702
    %v288 = vmul.f32 %v231, 1.702
    %v289 = vmul.f32 %v235, 1.702
    %v290 = vmul.f32 %v237, 1.702
    %v291 = vmul.f32 %v241, 1.702
    %v292 = vmul.f32 %v243, 1.702
    %v293 = vmul.f32 %v247, 1.702
    %v294 = vmul.f32 %v249, 1.702
    %v295 = vmul.f32 %v253, 1.702
    %v296 = vmul.f32 %v255, 1.702
    %v297 = vmul.f32 %v259, 1.702
    %v298 = vmul.f32 %v261, 1.702
    %v299 = vmul.f32 %v265, 1.702
    %v300 = vmul.f32 %v267, 1.702
    %v301 = vxor.u32 %v269, 2147483648
    %v302 = vxor.u32 %v270, 2147483648
    %v303 = vxor.u32 %v271, 2147483648
    %v304 = vxor.u32 %v272, 2147483648
    %v305 = vxor.u32 %v273, 2147483648
    %v306 = vxor.u32 %v274, 2147483648
    %v307 = vxor.u32 %v275, 2147483648
    %v308 = vxor.u32 %v276, 2147483648
    %v309 = vxor.u32 %v277, 2147483648
    %v310 = vxor.u32 %v278, 2147483648
    %v311 = vxor.u32 %v279, 2147483648
    %v312 = vxor.u32 %v280, 2147483648
    %v313 = vxor.u32 %v281, 2147483648
    %v314 = vxor.u32 %v282, 2147483648
    %v315 = vxor.u32 %v283, 2147483648
    %v316 = vxor.u32 %v284, 2147483648
    %v317 = vxor.u32 %v285, 2147483648
    %v318 = vxor.u32 %v286, 2147483648
    %v319 = vxor.u32 %v287, 2147483648
    %v320 = vxor.u32 %v288, 2147483648
    %v321 = vxor.u32 %v289, 2147483648
    %v322 = vxor.u32 %v290, 2147483648
    %v323 = vxor.u32 %v291, 2147483648
    %v324 = vxor.u32 %v292, 2147483648
    %v325 = vxor.u32 %v293, 2147483648
    %v326 = vxor.u32 %v294, 2147483648
    %v327 = vxor.u32 %v295, 2147483648
    %v328 = vxor.u32 %v296, 2147483648
    %v329 = vxor.u32 %v297, 2147483648
    %v330 = vxor.u32 %v298, 2147483648
    %v331 = vxor.u32 %v299, 2147483648
    %v332 = vxor.u32 %v300, 2147483648
    %v333 = vmul.f32 %v301, 1.442695
    %v334 = vpow.pop %v333
    %v335 = vmul.f32 %v302, 1.442695
    %v336 = vpow.pop %v335
    %v337 = vmul.f32 %v303, 1.442695
    %v338 = vpow.pop %v337
    %v339 = vmul.f32 %v304, 1.442695
    %v340 = vpow.pop %v339
    %v341 = vmul.f32 %v305, 1.442695
    %v342 = vpow.pop %v341
    %v343 = vmul.f32 %v306, 1.442695
    %v344 = vpow.pop %v343
    %v345 = vmul.f32 %v307, 1.442695
    %v346 = vpow.pop %v345
    %v347 = vmul.f32 %v308, 1.442695
    %v348 = vpow.pop %v347
    %v349 = vmul.f32 %v309, 1.442695
    %v350 = vpow.pop %v349
    %v351 = vmul.f32 %v310, 1.442695
    %v352 = vpow.pop %v351
    %v353 = vmul.f32 %v311, 1.442695
    %v354 = vpow.pop %v353
    %v355 = vmul.f32 %v312, 1.442695
    %v356 = vpow.pop %v355
    %v357 = vmul.f32 %v313, 1.442695
    %v358 = vpow.pop %v357
    %v359 = vmul.f32 %v314, 1.442695
    %v360 = vpow.pop %v359
    %v361 = vmul.f32 %v315, 1.442695
    %v362 = vpow.pop %v361
    %v363 = vmul.f32 %v316, 1.442695
    %v364 = vpow.pop %v363
    %v365 = vmul.f32 %v317, 1.442695
    %v366 = vpow.pop %v365
    %v367 = vmul.f32 %v318, 1.442695
    %v368 = vpow.pop %v367
    %v369 = vmul.f32 %v319, 1.442695
    %v370 = vpow.pop %v369
    %v371 = vmul.f32 %v320, 1.442695
    %v372 = vpow.pop %v371
    %v373 = vmul.f32 %v321, 1.442695
    %v374 = vpow.pop %v373
    %v375 = vmul.f32 %v322, 1.442695
    %v376 = vpow.pop %v375
    %v377 = vmul.f32 %v323, 1.442695
    %v378 = vpow.pop %v377
    %v379 = vmul.f32 %v324, 1.442695
    %v380 = vpow.pop %v379
    %v381 = vmul.f32 %v325, 1.442695
    %v382 = vpow.pop %v381
    %v383 = vmul.f32 %v326, 1.442695
    %v384 = vpow.pop %v383
    %v385 = vmul.f32 %v327, 1.442695
    %v386 = vpow.pop %v385
    %v387 = vmul.f32 %v328, 1.442695
    %v388 = vpow.pop %v387
    %v389 = vmul.f32 %v329, 1.442695
    %v390 = vpow.pop %v389
    %v391 = vmul.f32 %v330, 1.442695
    %v392 = vpow.pop %v391
    %v393 = vmul.f32 %v331, 1.442695
    %v394 = vpow.pop %v393
    %v395 = vmul.f32 %v332, 1.442695
    %v396 = vpow.pop %v395
    %v397 = vadd.f32 %v334, 1.0
    %v398 = vadd.f32 %v336, 1.0
    %v399 = vadd.f32 %v338, 1.0
    %v400 = vadd.f32 %v340, 1.0
    %v401 = vadd.f32 %v342, 1.0
    %v402 = vadd.f32 %v344, 1.0
    %v403 = vadd.f32 %v346, 1.0
    %v404 = vadd.f32 %v348, 1.0
    %v405 = vadd.f32 %v350, 1.0
    %v406 = vadd.f32 %v352, 1.0
    %v407 = vadd.f32 %v354, 1.0
    %v408 = vadd.f32 %v356, 1.0
    %v409 = vadd.f32 %v358, 1.0
    %v410 = vadd.f32 %v360, 1.0
    %v411 = vadd.f32 %v362, 1.0
    %v412 = vadd.f32 %v364, 1.0
    %v413 = vadd.f32 %v366, 1.0
    %v414 = vadd.f32 %v368, 1.0
    %v415 = vadd.f32 %v370, 1.0
    %v416 = vadd.f32 %v372, 1.0
    %v417 = vadd.f32 %v374, 1.0
    %v418 = vadd.f32 %v376, 1.0
    %v419 = vadd.f32 %v378, 1.0
    %v420 = vadd.f32 %v380, 1.0
    %v421 = vadd.f32 %v382, 1.0
    %v422 = vadd.f32 %v384, 1.0
    %v423 = vadd.f32 %v386, 1.0
    %v424 = vadd.f32 %v388, 1.0
    %v425 = vadd.f32 %v390, 1.0
    %v426 = vadd.f32 %v392, 1.0
    %v427 = vadd.f32 %v394, 1.0
    %v428 = vadd.f32 %v396, 1.0
    %v429 = vrcp.pop %v397
    %v430 = vmul.f32 1.0, %v429
    %v431 = vrcp.pop %v398
    %v432 = vmul.f32 1.0, %v431
    %v433 = vrcp.pop %v399
    %v434 = vmul.f32 1.0, %v433
    %v435 = vrcp.pop %v400
    %v436 = vmul.f32 1.0, %v435
    %v437 = vrcp.pop %v401
    %v438 = vmul.f32 1.0, %v437
    %v439 = vrcp.pop %v402
    %v440 = vmul.f32 1.0, %v439
    %v441 = vrcp.pop %v403
    %v442 = vmul.f32 1.0, %v441
    %v443 = vrcp.pop %v404
    %v444 = vmul.f32 1.0, %v443
    %v445 = vrcp.pop %v405
    %v446 = vmul.f32 1.0, %v445
    %v447 = vrcp.pop %v406
    %v448 = vmul.f32 1.0, %v447
    %v449 = vrcp.pop %v407
    %v450 = vmul.f32 1.0, %v449
    %v451 = vrcp.pop %v408
    %v452 = vmul.f32 1.0, %v451
    %v453 = vrcp.pop %v409
    %v454 = vmul.f32 1.0, %v453
    %v455 = vrcp.pop %v410
    %v456 = vmul.f32 1.0, %v455
    %v457 = vrcp.pop %v411
    %v458 = vmul.f32 1.0, %v457
    %v459 = vrcp.pop %v412
    %v460 = vmul.f32 1.0, %v459
    %v461 = vrcp.pop %v413
    %v462 = vmul.f32 1.0, %v461
    %v463 = vrcp.pop %v414
    %v464 = vmul.f32 1.0, %v463
    %v465 = vrcp.pop %v415
    %v466 = vmul.f32 1.0, %v465
    %v467 = vrcp.pop %v416
    %v468 = vmul.f32 1.0, %v467
    %v469 = vrcp.pop %v417
    %v470 = vmul.f32 1.0, %v469
    %v471 = vrcp.pop %v418
    %v472 = vmul.f32 1.0, %v471
    %v473 = vrcp.pop %v419
    %v474 = vmul.f32 1.0, %v473
    %v475 = vrcp.pop %v420
    %v476 = vmul.f32 1.0, %v475
    %v477 = vrcp.pop %v421
    %v478 = vmul.f32 1.0, %v477
    %v479 = vrcp.pop %v422
    %v480 = vmul.f32 1.0, %v479
    %v481 = vrcp.pop %v423
    %v482 = vmul.f32 1.0, %v481
    %v483 = vrcp.pop %v424
    %v484 = vmul.f32 1.0, %v483
    %v485 = vrcp.pop %v425
    %v486 = vmul.f32 1.0, %v485
    %v487 = vrcp.pop %v426
    %v488 = vmul.f32 1.0, %v487
    %v489 = vrcp.pop %v427
    %v490 = vmul.f32 1.0, %v489
    %v491 = vrcp.pop %v428
    %v492 = vmul.f32 1.0, %v491
    %v493 = vmul.f32 %v175, %v430
    %v494 = vmul.f32 %v177, %v432
    %v495 = vmul.f32 %v181, %v434
    %v496 = vmul.f32 %v183, %v436
    %v497 = vmul.f32 %v187, %v438
    %v498 = vmul.f32 %v189, %v440
    %v499 = vmul.f32 %v193, %v442
    %v500 = vmul.f32 %v195, %v444
    %v501 = vmul.f32 %v199, %v446
    %v502 = vmul.f32 %v201, %v448
    %v503 = vmul.f32 %v205, %v450
    %v504 = vmul.f32 %v207, %v452
    %v505 = vmul.f32 %v211, %v454
    %v506 = vmul.f32 %v213, %v456
    %v507 = vmul.f32 %v217, %v458
    %v508 = vmul.f32 %v219, %v460
    %v509 = vmul.f32 %v223, %v462
    %v510 = vmul.f32 %v225, %v464
    %v511 = vmul.f32 %v229, %v466
    %v512 = vmul.f32 %v231, %v468
    %v513 = vmul.f32 %v235, %v470
    %v514 = vmul.f32 %v237, %v472
    %v515 = vmul.f32 %v241, %v474
    %v516 = vmul.f32 %v243, %v476
    %v517 = vmul.f32 %v247, %v478
    %v518 = vmul.f32 %v249, %v480
    %v519 = vmul.f32 %v253, %v482
    %v520 = vmul.f32 %v255, %v484
    %v521 = vmul.f32 %v259, %v486
    %v522 = vmul.f32 %v261, %v488
    %v523 = vmul.f32 %v265, %v490
    %v524 = vmul.f32 %v267, %v492
    %v525 = vld [vmem:[#allocation4] sm:$0xff]
    %v526 = vld [vmem:[#allocation4 + $0x8] sm:$0xff]
    %v527 = vld [vmem:[#allocation4 + $0x10] sm:$0xff]
    %v528 = vld [vmem:[#allocation4 + $0x18] sm:$0xff]
    %v529 = vld [vmem:[#allocation4 + $0x20] sm:$0xff]
    %v530 = vld [vmem:[#allocation4 + $0x28] sm:$0xff]
    %v531 = vld [vmem:[#allocation4 + $0x30] sm:$0xff]
    %v532 = vld [vmem:[#allocation4 + $0x38] sm:$0xff]
    %v533 = vld [vmem:[#allocation4 + $0x40] sm:$0xff]
    %v534 = vld [vmem:[#allocation4 + $0x48] sm:$0xff]
    %v535 = vld [vmem:[#allocation4 + $0x50] sm:$0xff]
    %v536 = vld [vmem:[#allocation4 + $0x58] sm:$0xff]
    %v537 = vld [vmem:[#allocation4 + $0x60] sm:$0xff]
    %v538 = vld [vmem:[#allocation4 + $0x68] sm:$0xff]
    %v539 = vld [vmem:[#allocation4 + $0x70] sm:$0xff]
    %v540 = vld [vmem:[#allocation4 + $0x78] sm:$0xff]
    %v541 = vld [vmem:[#allocation4 + $0x80] sm:$0xff]
    %v542 = vld [vmem:[#allocation4 + $0x88] sm:$0xff]
    %v543 = vld [vmem:[#allocation4 + $0x90] sm:$0xff]
    %v544 = vld [vmem:[#allocation4 + $0x98] sm:$0xff]
    %v545 = vld [vmem:[#allocation4 + $0xa0] sm:$0xff]
    %v546 = vld [vmem:[#allocation4 + $0xa8] sm:$0xff]
    %v547 = vld [vmem:[#allocation4 + $0xb0] sm:$0xff]
    %v548 = vld [vmem:[#allocation4 + $0xb8] sm:$0xff]
    %v549 = vld [vmem:[#allocation4 + $0xc0] sm:$0xff]
    %v550 = vld [vmem:[#allocation4 + $0xc8] sm:$0xff]
    %v551 = vld [vmem:[#allocation4 + $0xd0] sm:$0xff]
    %v552 = vld [vmem:[#allocation4 + $0xd8] sm:$0xff]
    %v553 = vld [vmem:[#allocation4 + $0xe0] sm:$0xff]
    %v554 = vld [vmem:[#allocation4 + $0xe8] sm:$0xff]
    %v555 = vld [vmem:[#allocation4 + $0xf0] sm:$0xff]
    %v556 = vld [vmem:[#allocation4 + $0xf8] sm:$0xff]
    %v557 = vld [vmem:[%s4] sm:$0x1]
    %v559 = vlaneseq
    %v560 = vshrl.u32 %v559, 7
    %v561 = vsub.s32 0, %v560
    %v562 = vrot.slane %v557, %v561
    %564 = vmatprep.subr.mxu0 0.0
    %565 = vmatpush1.msra.mxu0 %v525
    %566 = vmatprep.subr.mxu0 0.0
    %567 = vmatpush1.msra.mxu0 %v526
    %568 = vmatprep.subr.mxu0 0.0
    %569 = vmatpush1.msra.mxu0 %v527
    %570 = vmatprep.subr.mxu0 0.0
    %571 = vmatpush1.msra.mxu0 %v528
    %572 = vmatprep.subr.mxu0 0.0
    %573 = vmatpush1.msra.mxu0 %v529
    %574 = vmatprep.subr.mxu0 0.0
    %575 = vmatpush1.msra.mxu0 %v530
    %576 = vmatprep.subr.mxu0 0.0
    %577 = vmatpush1.msra.mxu0 %v531
    %578 = vmatprep.subr.mxu0 0.0
    %579 = vmatpush1.msra.mxu0 %v532
    %580 = vmatprep.subr.mxu0 0.0
    %581 = vmatpush1.msra.mxu0 %v533
    %582 = vmatprep.subr.mxu0 0.0
    %583 = vmatpush1.msra.mxu0 %v534
    %584 = vmatprep.subr.mxu0 0.0
    %585 = vmatpush1.msra.mxu0 %v535
    %586 = vmatprep.subr.mxu0 0.0
    %587 = vmatpush1.msra.mxu0 %v536
    %588 = vmatprep.subr.mxu0 0.0
    %589 = vmatpush1.msra.mxu0 %v537
    %590 = vmatprep.subr.mxu0 0.0
    %591 = vmatpush1.msra.mxu0 %v538
    %592 = vmatprep.subr.mxu0 0.0
    %593 = vmatpush1.msra.mxu0 %v539
    %594 = vmatprep.subr.mxu0 0.0
    %595 = vmatpush1.msra.mxu0 %v540
    %596 = vmatprep.subr.mxu0 0.0
    %597 = vmatpush1.msra.mxu0 %v541
    %598 = vmatprep.subr.mxu0 0.0
    %599 = vmatpush1.msra.mxu0 %v542
    %600 = vmatprep.subr.mxu0 0.0
    %601 = vmatpush1.msra.mxu0 %v543
    %602 = vmatprep.subr.mxu0 0.0
    %603 = vmatpush1.msra.mxu0 %v544
    %604 = vmatprep.subr.mxu0 0.0
    %605 = vmatpush1.msra.mxu0 %v545
    %606 = vmatprep.subr.mxu0 0.0
    %607 = vmatpush1.msra.mxu0 %v546
    %608 = vmatprep.subr.mxu0 0.0
    %609 = vmatpush1.msra.mxu0 %v547
    %610 = vmatprep.subr.mxu0 0.0
    %611 = vmatpush1.msra.mxu0 %v548
    %612 = vmatprep.subr.mxu0 0.0
    %613 = vmatpush1.msra.mxu0 %v549
    %614 = vmatprep.subr.mxu0 0.0
    %615 = vmatpush1.msra.mxu0 %v550
    %616 = vmatprep.subr.mxu0 0.0
    %617 = vmatpush1.msra.mxu0 %v551
    %618 = vmatprep.subr.mxu0 0.0
    %619 = vmatpush1.msra.mxu0 %v552
    %620 = vmatprep.subr.mxu0 0.0
    %621 = vmatpush1.msra.mxu0 %v553
    %622 = vmatprep.subr.mxu0 0.0
    %623 = vmatpush1.msra.mxu0 %v554
    %624 = vmatprep.subr.mxu0 0.0
    %625 = vmatpush1.msra.mxu0 %v555
    %626 = vmatprep.subr.mxu0 0.0
    %627 = vmatpush1.msra.mxu0 %v556
    %628 = vmatprep.mubr.f32.mxu0 %v494
    %629 = vmatmul.mubr.f32.gmra.mrb[0].mxu0 %v493
    %v630 = vpop.f32.mrb[0].mxu0
    %v631 = vadd.f32 %v562, %v630
    %v632 = vpop.f32.mrb[0].mxu0
    %633 = vmatprep.mubr.f32.mxu0 %v496
    %634 = vmatmul.mubr.f32.gmra.mrb[0].mxu0 %v495
    %v635 = vpop.f32.mrb[0].mxu0
    %v636 = vadd.f32 %v562, %v635
    %v637 = vpop.f32.mrb[0].mxu0
    %638 = vmatprep.mubr.f32.mxu0 %v498
    %639 = vmatmul.mubr.f32.gmra.mrb[0].mxu0 %v497
    %v640 = vpop.f32.mrb[0].mxu0
    %v641 = vadd.f32 %v562, %v640
    %v642 = vpop.f32.mrb[0].mxu0
    %643 = vmatprep.mubr.f32.mxu0 %v500
    %644 = vmatmul.mubr.f32.gmra.mrb[0].mxu0 %v499
    %v645 = vpop.f32.mrb[0].mxu0
    %v646 = vadd.f32 %v562, %v645
    %v647 = vpop.f32.mrb[0].mxu0
    %648 = vmatprep.mubr.f32.mxu0 %v502
    %649 = vmatmul.mubr.f32.gmra.mrb[0].mxu0 %v501
    %v650 = vpop.f32.mrb[0].mxu0
    %v651 = vadd.f32 %v562, %v650
    %v652 = vpop.f32.mrb[0].mxu0
    %653 = vmatprep.mubr.f32.mxu0 %v504
    %654 = vmatmul.mubr.f32.gmra.mrb[0].mxu0 %v503
    %v655 = vpop.f32.mrb[0].mxu0
    %v656 = vadd.f32 %v562, %v655
    %v657 = vpop.f32.mrb[0].mxu0
    %658 = vmatprep.mubr.f32.mxu0 %v506
    %659 = vmatmul.mubr.f32.gmra.mrb[0].mxu0 %v505
    %v660 = vpop.f32.mrb[0].mxu0
    %v661 = vadd.f32 %v562, %v660
    %v662 = vpop.f32.mrb[0].mxu0
    %663 = vmatprep.mubr.f32.mxu0 %v508
    %664 = vmatmul.mubr.f32.gmra.mrb[0].mxu0 %v507
    %v665 = vpop.f32.mrb[0].mxu0
    %v666 = vadd.f32 %v562, %v665
    %v667 = vpop.f32.mrb[0].mxu0
    %668 = vmatprep.mubr.f32.mxu0 %v510
    %669 = vmatmul.mubr.f32.gmra.mrb[0].mxu0 %v509
    %v670 = vpop.f32.mrb[0].mxu0
    %v671 = vadd.f32 %v562, %v670
    %v672 = vpop.f32.mrb[0].mxu0
    %673 = vmatprep.mubr.f32.mxu0 %v512
    %674 = vmatmul.mubr.f32.gmra.mrb[0].mxu0 %v511
    %v675 = vpop.f32.mrb[0].mxu0
    %v676 = vadd.f32 %v562, %v675
    %v677 = vpop.f32.mrb[0].mxu0
    %678 = vmatprep.mubr.f32.mxu0 %v514
    %679 = vmatmul.mubr.f32.gmra.mrb[0].mxu0 %v513
    %v680 = vpop.f32.mrb[0].mxu0
    %v681 = vadd.f32 %v562, %v680
    %v682 = vpop.f32.mrb[0].mxu0
    %683 = vmatprep.mubr.f32.mxu0 %v516
    %684 = vmatmul.mubr.f32.gmra.mrb[0].mxu0 %v515
    %v685 = vpop.f32.mrb[0].mxu0
    %v686 = vadd.f32 %v562, %v685
    %v687 = vpop.f32.mrb[0].mxu0
    %688 = vmatprep.mubr.f32.mxu0 %v518
    %689 = vmatmul.mubr.f32.gmra.mrb[0].mxu0 %v517
    %v690 = vpop.f32.mrb[0].mxu0
    %v691 = vadd.f32 %v562, %v690
    %v692 = vpop.f32.mrb[0].mxu0
    %693 = vmatprep.mubr.f32.mxu0 %v520
    %694 = vmatmul.mubr.f32.gmra.mrb[0].mxu0 %v519
    %v695 = vpop.f32.mrb[0].mxu0
    %v696 = vadd.f32 %v562, %v695
    %v697 = vpop.f32.mrb[0].mxu0
    %698 = vmatprep.mubr.f32.mxu0 %v522
    %699 = vmatmul.mubr.f32.gmra.mrb[0].mxu0 %v521
    %v700 = vpop.f32.mrb[0].mxu0
    %v701 = vadd.f32 %v562, %v700
    %v702 = vpop.f32.mrb[0].mxu0
    %703 = vmatprep.mubr.f32.mxu0 %v524
    %704 = vmatmul.mubr.f32.gmra.mrb[0].mxu0 %v523
    %v705 = vpop.f32.mrb[0].mxu0
    %v706 = vadd.f32 %v562, %v705
    %v707 = vpop.f32.mrb[0].mxu0
    %708 = vdwg.mxu0
    %709 = vst [vmem:[%s5] sm:$0xff] %v631
    %710 = vst [vmem:[%s5 + $0x8] sm:$0xff] %v636
    %711 = vst [vmem:[%s5 + $0x10] sm:$0xff] %v641
    %712 = vst [vmem:[%s5 + $0x18] sm:$0xff] %v646
    %713 = vst [vmem:[%s5 + $0x20] sm:$0xff] %v651
    %714 = vst [vmem:[%s5 + $0x28] sm:$0xff] %v656
    %715 = vst [vmem:[%s5 + $0x30] sm:$0xff] %v661
    %716 = vst [vmem:[%s5 + $0x38] sm:$0xff] %v666
    %717 = vst [vmem:[%s5 + $0x40] sm:$0xff] %v671
    %718 = vst [vmem:[%s5 + $0x48] sm:$0xff] %v676
    %719 = vst [vmem:[%s5 + $0x50] sm:$0xff] %v681
    %720 = vst [vmem:[%s5 + $0x58] sm:$0xff] %v686
    %721 = vst [vmem:[%s5 + $0x60] sm:$0xff] %v691
    %722 = vst [vmem:[%s5 + $0x68] sm:$0xff] %v696
    %723 = vst [vmem:[%s5 + $0x70] sm:$0xff] %v701
    %724 = vst [vmem:[%s5 + $0x78] sm:$0xff] %v706
    // Predicated region
    $region30: #{boom_forward.1} parent=1 // pred_check
      _
    $region31: #{boom_forward.1} parent=1 // pred_check_branch
      %726 = sbr.rel (0) target = $region33
    $region32: #{boom_forward.1} parent=1 // pred_region
      _
    $region33: #{boom_forward.1} parent=1 // pred_fallthru
      _
    // Predicated region
    $region34: #{boom_forward.1} parent=1 // pred_check
      _
    $region35: #{boom_forward.1} parent=1 // pred_check_branch
      %728 = sbr.rel (0) target = $region37
    $region36: #{boom_forward.1} parent=1 // pred_region
      _
    $region37: #{boom_forward.1} parent=1 // pred_fallthru
      _
    %729 = vsyncpa [#allocation3], 1
    %730 = vsyncpa [#allocation5], 1

</llo_original>
